<compile_context>
chip_gen: v6e
topology: v6e:2x2x1
jax: 0.10.0
libtpu: 0.0.40
codegen_flags: <defaults>
</compile_context>

<pallas_src>
import jax
import jax.numpy as jnp
from jax import lax
from jax.experimental import pallas as pl
from jax.experimental.pallas import tpu as pltpu

H = 32        # self.hidden_size
CHUNK = 256   # batch lanes per inner-loop chunk (multiple of 128; keeps live vregs ~40)

MU_V = jnp.array([0.0, 3.0, 1.5], jnp.float32)
STD_V = jnp.array([0.5, 1.0, 1.0], jnp.float32)
MU_W = jnp.array([10.0, 0.0, 0.0], jnp.float32)
STD_W = jnp.array([10.0, 30.0, 10.0], jnp.float32)


# ---------------------------------------------------------------------------
# Kernel
# ---------------------------------------------------------------------------
def mlayer_kernel(x_ref, w12_ref, wdec_ref, bias_ref, out_ref):
    """x_ref/out_ref: [cpt, 8, CHUNK]; w12: [2H, 8]; wdec: [2H+8, H]; bias: [2H+8, CHUNK]."""
    n_chunks = x_ref.shape[0]

    def step(c, carry):
        x = x_ref[c]                                                     # [8, CHUNK]
        # m_layer_1 / m_layer_2 fused into one MXU push; b1/b2 folded into col 6 of W12
        # (the constant-ones input row), so no bias add is needed here.
        h12 = jnp.dot(w12_ref[...], x, preferred_element_type=jnp.float32)   # [2H, CHUNK]
        h = h12[:H, :] * h12[H:, :]                                      # [H, CHUNK]

        # m_layer_dec: Linear -> ReLU -> Linear -> ReLU -> Linear(H, 6)
        z = jnp.dot(wdec_ref[0:H, :], h, preferred_element_type=jnp.float32)
        z = jnp.maximum(z + bias_ref[0:H, :], 0.0)
        z = jnp.dot(wdec_ref[H:2 * H, :], z, preferred_element_type=jnp.float32)
        z = jnp.maximum(z + bias_ref[H:2 * H, :], 0.0)
        acc = jnp.dot(wdec_ref[2 * H:2 * H + 8, :], z,
                      preferred_element_type=jnp.float32)                # [8, CHUNK]

        # dt*std is folded into the (zero-padded-to-8-rows) last layer, and rows 0:6 of x
        # are raw [v, w], so x + acc is exactly unnormalize(norm + acc*dt).  Rows 6:8 of
        # the output are pass-through garbage and are sliced off by the wrapper.
        out_ref[c] = x + (acc + bias_ref[2 * H:2 * H + 8, :])
        return carry

    unroll = 2 if (n_chunks % 2 == 0 and n_chunks > 1) else 1
    lax.fori_loop(0, n_chunks, step, None, unroll=unroll)


# ---------------------------------------------------------------------------
# Parameter init (matches MLayer.__init__ / _init_weights)
# ---------------------------------------------------------------------------
def init_params(key, hidden_size=H):
    ks = jax.random.split(key, 6)

    def lin(k, fan_in, fan_out):
        # _init_weights: weight ~ N(0, 1e-6), bias = 0; torch weight is [out, in]
        w = jax.random.normal(k, (fan_out, fan_in), jnp.float32) * 1e-6
        b = jnp.zeros((fan_out,), jnp.float32)
        return w, b

    w1, b1 = lin(ks[0], 8, hidden_size)
    w2, b2 = lin(ks[1], 8, hidden_size)
    wd1, bd1 = lin(ks[2], hidden_size, hidden_size)
    wd2, bd2 = lin(ks[3], hidden_size, hidden_size)
    wd3, bd3 = lin(ks[4], hidden_size, 6)
    param1 = jax.random.uniform(ks[5], (1, 1), jnp.float32) * 1e-6  # unused in forward
    return dict(w1=w1, b1=b1, w2=w2, b2=b2,
                wd1=wd1, bd1=bd1, wd2=wd2, bd2=bd2,
                wd3=wd3, bd3=bd3, param1=param1)


# ---------------------------------------------------------------------------
# Fold normalization / un-normalization / dt / input biases into the weights
# and pack everything into three resident slabs (done once per (params, dt)).
# ---------------------------------------------------------------------------
def _pack_params(params, dt):
    # Kernel row order is [v(3), w(3), 1, b]; torch input column order is [1, b, v, w].
    perm = jnp.array([2, 3, 4, 5, 6, 7, 0, 1], jnp.int32)
    mu_x = jnp.concatenate([jnp.zeros((2,), jnp.float32), MU_V, MU_W])
    std_x = jnp.concatenate([jnp.ones((2,), jnp.float32), STD_V, STD_W])
    inv_std = 1.0 / std_x

    def fold_in(wt, bias):
        # W @ ((x_raw - mu)/std) + b  ==  (W/std) @ x_raw + (b - W @ (mu/std))
        wf = (wt * inv_std[None, :])[:, perm]
        bf = bias - wt @ (mu_x * inv_std)
        return wf, bf

    w1f, b1f = fold_in(params['w1'], params['b1'])
    w2f, b2f = fold_in(params['w2'], params['b2'])
    w12 = jnp.concatenate([w1f, w2f], axis=0)                         # [2H, 8]
    # x row 6 is the constant-ones row -> fold b1/b2 into column 6 (exact).
    w12 = w12.at[:, 6].add(jnp.concatenate([b1f, b2f]))

    # v_new = v + dt*std_v*acc_v ; w_new = w + dt*std_w*acc_w  -> fold dt*std into the
    # last layer and zero-pad it to 8 output rows.
    s = jnp.concatenate([STD_V, STD_W]) * jnp.float32(dt)             # [6]
    wd3f = jnp.pad(params['wd3'] * s[:, None], ((0, 2), (0, 0)))      # [8, H]
    bd3f = jnp.pad(params['bd3'] * s, ((0, 2),))                      # [8]

    wdec = jnp.concatenate([params['wd1'], params['wd2'], wd3f], axis=0)       # [2H+8, H]
    bias_col = jnp.concatenate([params['bd1'], params['bd2'], bd3f])[:, None]  # [2H+8, 1]
    bias = jnp.broadcast_to(bias_col, (2 * H + 8, CHUNK))             # pre-broadcast, lane-dense
    return w12, wdec, bias


# ---------------------------------------------------------------------------
# Generation-aware tiling
# ---------------------------------------------------------------------------
def _tile_plan(batch):
    """Returns (chunks_per_tile, n_tiles, vmem_limit_bytes)."""
    kind = ""
    try:
        kind = jax.devices()[0].device_kind.lower()
    except Exception:
        pass
    if "v7" in kind or "7x" in kind:
        max_cpt, vmem_limit = 128, 48 << 20     # 32K lanes/tile; 64 MiB VMEM per TC
    elif "v6" in kind:
        max_cpt, vmem_limit = 256, 64 << 20     # 64K lanes/tile; 128 MiB VMEM
    elif "v5e" in kind or "v5 lite" in kind or "v5lite" in kind:
        max_cpt, vmem_limit = 64, 32 << 20      # 16K lanes/tile; default scoped is 16 MiB
    else:
        max_cpt, vmem_limit = 64, None          # conservative default (v4/v5p/unknown)

    n_needed = pl.cdiv(batch, CHUNK)
    # Keep >= 2 grid steps whenever the batch allows so 2-TC parts (v7x) get both
    # cores busy under dimension_semantics=("parallel",); one extra step costs ~0.35us.
    min_tiles = 2 if n_needed >= 2 else 1
    n_tiles = max(min_tiles, pl.cdiv(n_needed, max_cpt))
    chunks_per_tile = pl.cdiv(n_needed, n_tiles)
    return chunks_per_tile, n_tiles, vmem_limit


# ---------------------------------------------------------------------------
# Kernel launcher on the resident (packed) layout
# ---------------------------------------------------------------------------
def mlayer_apply_packed(x3, w12, wdec, bias, *, chunks_per_tile, n_tiles,
                        vmem_limit_bytes=None):
    """Fused MLayer update on state already in the tiled batch-on-lane layout.

    x3: [n_tiles*chunks_per_tile, 8, CHUNK] f32 with rows = [v(3), w(3), 1, b].
    Returns the same layout with rows 0:6 replaced by [v_new, w_new] (rows 6:8 are
    pass-through/garbage).  Call this directly inside a trajectory loop to keep the
    state resident in this layout and skip the per-call transposes in mlayer_forward.
    """
    n_total = n_tiles * chunks_per_tile
    assert x3.shape == (n_total, 8, CHUNK), x3.shape
    return pl.pallas_call(
        mlayer_kernel,
        out_shape=jax.ShapeDtypeStruct((n_total, 8, CHUNK), jnp.float32),
        grid=(n_tiles,),
        in_specs=[
            pl.BlockSpec((chunks_per_tile, 8, CHUNK), lambda i: (i, 0, 0)),  # state tile
            pl.BlockSpec(w12.shape, lambda i: (0, 0)),    # weight slabs stay resident
            pl.BlockSpec(wdec.shape, lambda i: (0, 0)),
            pl.BlockSpec(bias.shape, lambda i: (0, 0)),
        ],
        out_specs=pl.BlockSpec((chunks_per_tile, 8, CHUNK), lambda i: (i, 0, 0)),
        compiler_params=pltpu.CompilerParams(
            dimension_semantics=("parallel",),
            vmem_limit_bytes=vmem_limit_bytes),
    )(x3, w12, wdec, bias)


# ---------------------------------------------------------------------------
# Module-compatible forward
# ---------------------------------------------------------------------------
def mlayer_forward(params, b, v, w, dt):
    """b: [..., 1], v/w: [..., 3] (supports [B,3] or [B,1,3] like the module)."""
    out_shape_vw = v.shape
    b2 = jnp.asarray(b, jnp.float32).reshape(-1, 1)
    v2 = jnp.asarray(v, jnp.float32).reshape(-1, 3)
    w2 = jnp.asarray(w, jnp.float32).reshape(-1, 3)
    B = b2.shape[0]

    w12, wdec, bias = _pack_params(params, dt)
    cpt, n_tiles, vmem_limit = _tile_plan(B)
    n_total = n_tiles * cpt
    b_pad = n_total * CHUNK

    # Pack rows [v, w, 1, b] into the tiled batch-on-lane layout.
    # TODO(synk): when this layer is stepped many times per trajectory, keep the state
    # in this [n, 8, CHUNK] layout between steps (mlayer_apply_packed) and/or hoist the
    # timestep loop into the kernel so these per-step layout transposes and per-call HBM
    # round-trips of the state disappear.
    x_rows = jnp.concatenate([v2, w2, jnp.ones_like(b2), b2], axis=-1)   # [B, 8]
    if b_pad != B:
        x_rows = jnp.pad(x_rows, ((0, b_pad - B), (0, 0)))               # zero-pad batch
    x3 = x_rows.reshape(n_total, CHUNK, 8).transpose(0, 2, 1)            # [n, 8, CHUNK]

    out3 = mlayer_apply_packed(x3, w12, wdec, bias,
                               chunks_per_tile=cpt, n_tiles=n_tiles,
                               vmem_limit_bytes=vmem_limit)

    out_rows = out3.transpose(0, 2, 1).reshape(b_pad, 8)[:B]             # [B, 8]
    v_new = out_rows[:, 0:3].reshape(out_shape_vw)
    w_new = out_rows[:, 3:6].reshape(out_shape_vw)
    return v_new, w_new


# ---------------------------------------------------------------------------
# Pure-JAX reference (matches the PyTorch forward, un-folded)
# ---------------------------------------------------------------------------
def mlayer_reference(params, b, v, w, dt):
    v_n = (v - MU_V) / STD_V
    w_n = (w - MU_W) / STD_W
    x = jnp.concatenate([jnp.ones_like(b), b, v_n, w_n], axis=-1)
    h1 = x @ params['w1'].T + params['b1']
    h2 = x @ params['w2'].T + params['b2']
    h = h1 * h2
    z = jnp.maximum(h @ params['wd1'].T + params['bd1'], 0.0)
    z = jnp.maximum(z @ params['wd2'].T + params['bd2'], 0.0)
    acc = z @ params['wd3'].T + params['bd3']
    v_new = (v_n + acc[..., :3] * dt) * STD_V + MU_V
    w_new = (w_n + acc[..., 3:] * dt) * STD_W + MU_W
    return v_new, w_new


if __name__ == "__main__":
    key = jax.random.PRNGKey(0)
    kp, kb, kv, kw = jax.random.split(key, 4)

    params = init_params(kp)
    dt = 0.01

    # Small shapes consistent with the module forward (batch=8).
    B = 8
    b_in = jax.random.normal(kb, (B, 1), jnp.float32)
    v_in = jax.random.normal(kv, (B, 3), jnp.float32) * 2.0 + 1.0
    w_in = jax.random.normal(kw, (B, 3), jnp.float32) * 5.0

    v_new, w_new = mlayer_forward(params, b_in, v_in, w_in, dt)
    jax.block_until_ready((v_new, w_new))
    v_ref, w_ref = mlayer_reference(params, b_in, v_in, w_in, dt)
    assert v_new.shape == (B, 3) and w_new.shape == (B, 3)
    assert jnp.allclose(v_new, v_ref, atol=1e-5, rtol=1e-5)
    assert jnp.allclose(w_new, w_ref, atol=1e-5, rtol=1e-5)

    # Second check: multi-tile grid + multi-chunk inner loop + non-multiple-of-CHUNK padding.
    B2 = 1337
    kb2, kv2, kw2 = jax.random.split(kb, 3)
    b_in2 = jax.random.normal(kb2, (B2, 1), jnp.float32)
    v_in2 = jax.random.normal(kv2, (B2, 3), jnp.float32) * 2.0 + 1.0
    w_in2 = jax.random.normal(kw2, (B2, 3), jnp.float32) * 5.0
    v_new2, w_new2 = mlayer_forward(params, b_in2, v_in2, w_in2, dt)
    jax.block_until_ready((v_new2, w_new2))
    v_ref2, w_ref2 = mlayer_reference(params, b_in2, v_in2, w_in2, dt)
    assert jnp.allclose(v_new2, v_ref2, atol=1e-5, rtol=1e-5)
    assert jnp.allclose(w_new2, w_ref2, atol=1e-5, rtol=1e-5)

    print("KERNEL_OK")
</pallas_src>

<mosaic_0001>
module attributes {stable_mosaic.version = 11 : i64} {
  func.func @mlayer_kernel(%arg0: i32, %arg1: memref<1x8x256xf32, #tpu.memory_space<vmem>>, %arg2: memref<64x8xf32, #tpu.memory_space<vmem>>, %arg3: memref<72x32xf32, #tpu.memory_space<vmem>>, %arg4: memref<72x256xf32, #tpu.memory_space<vmem>>, %arg5: memref<1x8x256xf32, #tpu.memory_space<vmem>>) attributes {dimension_semantics = [#tpu.dimension_semantics<parallel>], iteration_bounds = array<i64: 1>, scalar_prefetch = 0 : i64, scratch_operands = 0 : i64, tpu.core_type = #tpu.core_type<tc>, window_params = [{transform_indices = @transform_0, window_bounds = array<i64: 1, 8, 256>}, {pipeline_mode = #tpu.pipeline_mode<synchronous>, transform_indices = @transform_1, window_bounds = array<i64: 64, 8>}, {pipeline_mode = #tpu.pipeline_mode<synchronous>, transform_indices = @transform_2, window_bounds = array<i64: 72, 32>}, {pipeline_mode = #tpu.pipeline_mode<synchronous>, transform_indices = @transform_3, window_bounds = array<i64: 72, 256>}, {transform_indices = @transform_4, window_bounds = array<i64: 1, 8, 256>}]} {
    %c0_i32 = arith.constant 0 : i32
    %0 = arith.index_cast %c0_i32 : i32 to index
    %c0 = arith.constant 0 : index
    %c0_0 = arith.constant 0 : index
    %1 = vector.load %arg1[%0, %c0, %c0_0] : memref<1x8x256xf32, #tpu.memory_space<vmem>>, vector<1x8x256xf32>
    %2 = vector.shape_cast %1 : vector<1x8x256xf32> to vector<8x256xf32>
    %c0_1 = arith.constant 0 : index
    %c0_2 = arith.constant 0 : index
    %3 = vector.load %arg2[%c0_1, %c0_2] : memref<64x8xf32, #tpu.memory_space<vmem>>, vector<64x8xf32>
    %cst = arith.constant dense<0.000000e+00> : vector<64x256xf32>
    %4 = tpu.matmul %3, %2, %cst {dimension_numbers = #tpu.dot_dimension_numbers<[1], [0], [0], [1], [0, 0, 1, 1], [], []>} : vector<64x8xf32>, vector<8x256xf32>, vector<64x256xf32> -> vector<64x256xf32>
    %5 = vector.extract_strided_slice %4 {offsets = [0, 0], sizes = [32, 256], strides = [1, 1]} : vector<64x256xf32> to vector<32x256xf32>
    %6 = vector.extract_strided_slice %4 {offsets = [32, 0], sizes = [32, 256], strides = [1, 1]} : vector<64x256xf32> to vector<32x256xf32>
    %7 = arith.mulf %5, %6 : vector<32x256xf32>
    %c0_3 = arith.constant 0 : index
    %c0_4 = arith.constant 0 : index
    %8 = vector.load %arg3[%c0_3, %c0_4] : memref<72x32xf32, #tpu.memory_space<vmem>>, vector<32x32xf32>
    %cst_5 = arith.constant dense<0.000000e+00> : vector<32x256xf32>
    %9 = tpu.matmul %8, %7, %cst_5 {dimension_numbers = #tpu.dot_dimension_numbers<[1], [0], [0], [1], [0, 0, 1, 1], [], []>} : vector<32x32xf32>, vector<32x256xf32>, vector<32x256xf32> -> vector<32x256xf32>
    %c0_6 = arith.constant 0 : index
    %c0_7 = arith.constant 0 : index
    %10 = vector.load %arg4[%c0_6, %c0_7] : memref<72x256xf32, #tpu.memory_space<vmem>>, vector<32x256xf32>
    %11 = arith.addf %9, %10 : vector<32x256xf32>
    %cst_8 = arith.constant 0.000000e+00 : f32
    %12 = vector.broadcast %cst_8 : f32 to vector<32x256xf32>
    %13 = arith.maximumf %11, %12 : vector<32x256xf32>
    %c32 = arith.constant 32 : index
    %c0_9 = arith.constant 0 : index
    %14 = vector.load %arg3[%c32, %c0_9] : memref<72x32xf32, #tpu.memory_space<vmem>>, vector<32x32xf32>
    %cst_10 = arith.constant dense<0.000000e+00> : vector<32x256xf32>
    %15 = tpu.matmul %14, %13, %cst_10 {dimension_numbers = #tpu.dot_dimension_numbers<[1], [0], [0], [1], [0, 0, 1, 1], [], []>} : vector<32x32xf32>, vector<32x256xf32>, vector<32x256xf32> -> vector<32x256xf32>
    %c32_11 = arith.constant 32 : index
    %c0_12 = arith.constant 0 : index
    %16 = vector.load %arg4[%c32_11, %c0_12] : memref<72x256xf32, #tpu.memory_space<vmem>>, vector<32x256xf32>
    %17 = arith.addf %15, %16 : vector<32x256xf32>
    %cst_13 = arith.constant 0.000000e+00 : f32
    %18 = vector.broadcast %cst_13 : f32 to vector<32x256xf32>
    %19 = arith.maximumf %17, %18 : vector<32x256xf32>
    %c64 = arith.constant 64 : index
    %c0_14 = arith.constant 0 : index
    %20 = vector.load %arg3[%c64, %c0_14] : memref<72x32xf32, #tpu.memory_space<vmem>>, vector<8x32xf32>
    %cst_15 = arith.constant dense<0.000000e+00> : vector<8x256xf32>
    %21 = tpu.matmul %20, %19, %cst_15 {dimension_numbers = #tpu.dot_dimension_numbers<[1], [0], [0], [1], [0, 0, 1, 1], [], []>} : vector<8x32xf32>, vector<32x256xf32>, vector<8x256xf32> -> vector<8x256xf32>
    %c64_16 = arith.constant 64 : index
    %c0_17 = arith.constant 0 : index
    %22 = vector.load %arg4[%c64_16, %c0_17] : memref<72x256xf32, #tpu.memory_space<vmem>>, vector<8x256xf32>
    %23 = arith.addf %21, %22 : vector<8x256xf32>
    %24 = arith.addf %2, %23 : vector<8x256xf32>
    %25 = arith.index_cast %c0_i32 : i32 to index
    %c0_18 = arith.constant 0 : index
    %c0_19 = arith.constant 0 : index
    %26 = vector.load %arg5[%25, %c0_18, %c0_19] : memref<1x8x256xf32, #tpu.memory_space<vmem>>, vector<1x8x256xf32>
    %27 = vector.shape_cast %26 : vector<1x8x256xf32> to vector<8x256xf32>
    %28 = vector.shape_cast %24 : vector<8x256xf32> to vector<1x8x256xf32>
    tpu.vector_store %arg5[%25, %c0_18, %c0_19], %28 {strides = array<i32>} : memref<1x8x256xf32, #tpu.memory_space<vmem>>, vector<1x8x256xf32>,
    %c1_i32 = arith.constant 1 : i32
    return
  }
  func.func @transform_0(%arg0: i32) -> (i32, i32, i32) {
    %c0_i32 = arith.constant 0 : i32
    %c0_i32_0 = arith.constant 0 : i32
    %c0_i32_1 = arith.constant 0 : i32
    return %arg0, %c0_i32, %c0_i32_0 : i32, i32, i32
  }
  func.func @transform_1(%arg0: i32) -> (i32, i32) {
    %c0_i32 = arith.constant 0 : i32
    %c0_i32_0 = arith.constant 0 : i32
    %c0_i32_1 = arith.constant 0 : i32
    return %c0_i32, %c0_i32_0 : i32, i32
  }
  func.func @transform_2(%arg0: i32) -> (i32, i32) {
    %c0_i32 = arith.constant 0 : i32
    %c0_i32_0 = arith.constant 0 : i32
    %c0_i32_1 = arith.constant 0 : i32
    return %c0_i32, %c0_i32_0 : i32, i32
  }
  func.func @transform_3(%arg0: i32) -> (i32, i32) {
    %c0_i32 = arith.constant 0 : i32
    %c0_i32_0 = arith.constant 0 : i32
    %c0_i32_1 = arith.constant 0 : i32
    return %c0_i32, %c0_i32_0 : i32, i32
  }
  func.func @transform_4(%arg0: i32) -> (i32, i32, i32) {
    %c0_i32 = arith.constant 0 : i32
    %c0_i32_0 = arith.constant 0 : i32
    %c0_i32_1 = arith.constant 0 : i32
    return %arg0, %c0_i32, %c0_i32_0 : i32, i32, i32
  }
}

</mosaic_0001>

<llo_original>
// kernel: tpu_custom_call.1
$region0: #{tpu_custom_call.1}
  #allocation0 [shape = 'u32[]', space=smem, size = 0x4, offset = 0x4, fixed_abs, tag = 'smem constant byte address 0x4 - core index']
  #allocation1 [shape = 'u32[144,128]{1,0:T(1,128)}', space=vmem, size = 0x12000, scoped, tag = 'internal scratch']
  %s0 = inlined_call_operand.vmem [shape: f32[1,8,256], index: 0, kind: input, shape index: {}]
  %s1 = inlined_call_operand.vmem [shape: f32[64,8], index: 1, kind: input, shape index: {}]
  %s2 = inlined_call_operand.vmem [shape: f32[72,32], index: 2, kind: input, shape index: {}]
  %s3 = inlined_call_operand.vmem [shape: f32[72,256], index: 3, kind: input, shape index: {}]
  %s4 = inlined_call_operand.hbm [shape: f32[1,8,256], index: 4, kind: output, shape index: {}]
  %s5 = sld [smem:[#allocation0]]
  $region26: #{tpu_custom_call.1} parent=0
    _
  %s7 = ssub.s32 1, %s5
  %s8 = scalar_select 0, %s7, %s5
  $region1: #{tpu_custom_call.1} parent=0
    #allocation2 [shape = 'u8[8192]{0}', space=vmem, size = 0x2000, scoped, tag = 'output window, operand 0, single buffered']
    #allocation3 [shape = 's32[1]{0}', space=sflag, size = 0x4, scoped, tag = 'scoped memory for tpu_custom_call.1']
    %9 = vsyncpa [#allocation3], 0
    // Predicated region
    $region2: #{tpu_custom_call.1} parent=1 // pred_check
      _
    $region3: #{tpu_custom_call.1} parent=1 // pred_check_branch
      %11 = sbr.rel (0) target = $region5
    $region4: #{tpu_custom_call.1} parent=1 // pred_region
      _
    $region5: #{tpu_custom_call.1} parent=1 // pred_fallthru
      _
    // Predicated region
    $region6: #{tpu_custom_call.1} parent=1 // pred_check
      _
    $region7: #{tpu_custom_call.1} parent=1 // pred_check_branch
      %13 = sbr.rel (0) target = $region9
    $region8: #{tpu_custom_call.1} parent=1 // pred_region
      _
    $region9: #{tpu_custom_call.1} parent=1 // pred_fallthru
      _
    // Predicated region
    $region10: #{tpu_custom_call.1} parent=1 // pred_check
      _
    $region11: #{tpu_custom_call.1} parent=1 // pred_check_branch
      %15 = sbr.rel (0) target = $region13
    $region12: #{tpu_custom_call.1} parent=1 // pred_region
      _
    $region13: #{tpu_custom_call.1} parent=1 // pred_fallthru
      _
    // Predicated region
    $region14: #{tpu_custom_call.1} parent=1 // pred_check
      _
    $region15: #{tpu_custom_call.1} parent=1 // pred_check_branch
      %17 = sbr.rel (0) target = $region17
    $region16: #{tpu_custom_call.1} parent=1 // pred_region
      _
    $region17: #{tpu_custom_call.1} parent=1 // pred_fallthru
      _
    %v18 = vld [vmem:[%s0] sm:$0xff]
    %v19 = vld [vmem:[%s0 + $0x8] sm:$0xff]
    %v20 = vld [vmem:[%s1] sm:$0xff]
    %v21 = vld [vmem:[%s1 + $0x8] sm:$0xff]
    %v22 = vld [vmem:[%s1 + $0x10] sm:$0xff]
    %v23 = vld [vmem:[%s1 + $0x18] sm:$0xff]
    %v24 = vld [vmem:[%s1 + $0x20] sm:$0xff]
    %v25 = vld [vmem:[%s1 + $0x28] sm:$0xff]
    %v26 = vld [vmem:[%s1 + $0x30] sm:$0xff]
    %v27 = vld [vmem:[%s1 + $0x38] sm:$0xff]
    %vm28 = vcmask 64512
    %v30 = vsel %vm28, %v20, 0
    %v33 = vsel %vm28, %v21, 0
    %v36 = vsel %vm28, %v22, 0
    %v39 = vsel %vm28, %v23, 0
    %v42 = vsel %vm28, %v24, 0
    %v45 = vsel %vm28, %v25, 0
    %v48 = vsel %vm28, %v26, 0
    %v51 = vsel %vm28, %v27, 0
    %53 = vmatprep.subr.mxu0 0.0
    %54 = vmatpush1.msra.mxu0 0.0
    %55 = vmatprep.subr.mxu0 0.0
    %56 = vmatpush1.msra.mxu0 0.0
    %57 = vmatprep.subr.mxu0 0.0
    %58 = vmatpush1.msra.mxu0 0.0
    %59 = vmatprep.subr.mxu0 0.0
    %60 = vmatpush1.msra.mxu0 0.0
    %61 = vmatprep.subr.mxu0 0.0
    %62 = vmatpush1.msra.mxu0 0.0
    %63 = vmatprep.subr.mxu0 0.0
    %64 = vmatpush1.msra.mxu0 0.0
    %65 = vmatprep.subr.mxu0 0.0
    %66 = vmatpush1.msra.mxu0 0.0
    %67 = vmatprep.subr.mxu0 0.0
    %68 = vmatpush1.msra.mxu0 0.0
    %69 = vmatprep.subr.mxu0 0.0
    %70 = vmatpush1.msra.mxu0 0.0
    %71 = vmatprep.subr.mxu0 0.0
    %72 = vmatpush1.msra.mxu0 0.0
    %73 = vmatprep.subr.mxu0 0.0
    %74 = vmatpush1.msra.mxu0 0.0
    %75 = vmatprep.subr.mxu0 0.0
    %76 = vmatpush1.msra.mxu0 0.0
    %77 = vmatprep.subr.mxu0 0.0
    %78 = vmatpush1.msra.mxu0 0.0
    %79 = vmatprep.subr.mxu0 0.0
    %80 = vmatpush1.msra.mxu0 0.0
    %81 = vmatprep.subr.mxu0 0.0
    %82 = vmatpush1.msra.mxu0 0.0
    %83 = vmatprep.subr.mxu0 %v19
    %84 = vmatpush1.msra.mxu0 %v18
    %85 = vmatprep.subr.mxu0 0.0
    %86 = vmatpush2.msra.mxu0 0.0
    %87 = vmatprep.subr.mxu0 0.0
    %88 = vmatpush2.msra.mxu0 0.0
    %89 = vmatprep.subr.mxu0 0.0
    %90 = vmatpush2.msra.mxu0 0.0
    %91 = vmatprep.subr.mxu0 0.0
    %92 = vmatpush2.msra.mxu0 0.0
    %93 = vmatprep.subr.mxu0 0.0
    %94 = vmatpush2.msra.mxu0 0.0
    %95 = vmatprep.subr.mxu0 0.0
    %96 = vmatpush2.msra.mxu0 0.0
    %97 = vmatprep.subr.mxu0 0.0
    %98 = vmatpush2.msra.mxu0 0.0
    %99 = vmatprep.subr.mxu0 0.0
    %100 = vmatpush2.msra.mxu0 0.0
    %101 = vmatprep.subr.mxu0 0.0
    %102 = vmatpush2.msra.mxu0 0.0
    %103 = vmatprep.subr.mxu0 0.0
    %104 = vmatpush2.msra.mxu0 0.0
    %105 = vmatprep.subr.mxu0 0.0
    %106 = vmatpush2.msra.mxu0 0.0
    %107 = vmatprep.subr.mxu0 0.0
    %108 = vmatpush2.msra.mxu0 0.0
    %109 = vmatprep.subr.mxu0 0.0
    %110 = vmatpush2.msra.mxu0 0.0
    %111 = vmatprep.subr.mxu0 0.0
    %112 = vmatpush2.msra.mxu0 0.0
    %113 = vmatprep.subr.mxu0 0.0
    %114 = vmatpush2.msra.mxu0 0.0
    %115 = vmatprep.subr.mxu0 0.0
    %116 = vmatpush2.msra.mxu0 0.0
    %117 = vmatprep.mubr.f32.mxu0 0.0
    %118 = vmatmul.mubr.f32.gmra.mxu0 %v30
    %v119 = vpop.f32.mrf.mxu0
    %v120 = vadd.f32 0.0, %v119
    %v121 = vpop.f32.mrf.mxu0
    %v122 = vadd.f32 0.0, %v121
    %123 = vmatprep.mubr.f32.mxu0 0.0
    %124 = vmatmul.mubr.f32.gmra.mxu0 %v33
    %v125 = vpop.f32.mrf.mxu0
    %v126 = vadd.f32 0.0, %v125
    %v127 = vpop.f32.mrf.mxu0
    %v128 = vadd.f32 0.0, %v127
    %129 = vmatprep.mubr.f32.mxu0 0.0
    %130 = vmatmul.mubr.f32.gmra.mxu0 %v36
    %v131 = vpop.f32.mrf.mxu0
    %v132 = vadd.f32 0.0, %v131
    %v133 = vpop.f32.mrf.mxu0
    %v134 = vadd.f32 0.0, %v133
    %135 = vmatprep.mubr.f32.mxu0 0.0
    %136 = vmatmul.mubr.f32.gmra.mxu0 %v39
    %v137 = vpop.f32.mrf.mxu0
    %v138 = vadd.f32 0.0, %v137
    %v139 = vpop.f32.mrf.mxu0
    %v140 = vadd.f32 0.0, %v139
    %141 = vmatprep.mubr.f32.mxu0 0.0
    %142 = vmatmul.mubr.f32.gmra.mxu0 %v42
    %v143 = vpop.f32.mrf.mxu0
    %v144 = vadd.f32 0.0, %v143
    %v145 = vpop.f32.mrf.mxu0
    %v146 = vadd.f32 0.0, %v145
    %147 = vmatprep.mubr.f32.mxu0 0.0
    %148 = vmatmul.mubr.f32.gmra.mxu0 %v45
    %v149 = vpop.f32.mrf.mxu0
    %v150 = vadd.f32 0.0, %v149
    %v151 = vpop.f32.mrf.mxu0
    %v152 = vadd.f32 0.0, %v151
    %153 = vmatprep.mubr.f32.mxu0 0.0
    %154 = vmatmul.mubr.f32.gmra.mxu0 %v48
    %v155 = vpop.f32.mrf.mxu0
    %v156 = vadd.f32 0.0, %v155
    %v157 = vpop.f32.mrf.mxu0
    %v158 = vadd.f32 0.0, %v157
    %159 = vmatprep.mubr.f32.mxu0 0.0
    %160 = vmatmul.mubr.f32.gmra.mxu0 %v51
    %v161 = vpop.f32.mrf.mxu0
    %v162 = vadd.f32 0.0, %v161
    %v163 = vpop.f32.mrf.mxu0
    %v164 = vadd.f32 0.0, %v163
    %165 = vdwg.mxu0
    %v166 = vmul.f32 %v120, %v144
    %v167 = vmul.f32 %v122, %v146
    %v168 = vmul.f32 %v126, %v150
    %v169 = vmul.f32 %v128, %v152
    %v170 = vmul.f32 %v132, %v156
    %v171 = vmul.f32 %v134, %v158
    %v172 = vmul.f32 %v138, %v162
    %v173 = vmul.f32 %v140, %v164
    %v174 = vld [vmem:[%s2] sm:$0xff]
    %v175 = vld [vmem:[%s2 + $0x8] sm:$0xff]
    %v176 = vld [vmem:[%s2 + $0x10] sm:$0xff]
    %v177 = vld [vmem:[%s2 + $0x18] sm:$0xff]
    %v178 = vld [vmem:[%s3] sm:$0xff]
    %v179 = vld [vmem:[%s3 + $0x8] sm:$0xff]
    %v180 = vld [vmem:[%s3 + $0x10] sm:$0xff]
    %v181 = vld [vmem:[%s3 + $0x18] sm:$0xff]
    %v182 = vld [vmem:[%s3 + $0x20] sm:$0xff]
    %v183 = vld [vmem:[%s3 + $0x28] sm:$0xff]
    %v184 = vld [vmem:[%s3 + $0x30] sm:$0xff]
    %v185 = vld [vmem:[%s3 + $0x38] sm:$0xff]
    %vm186 = vcmask 261120
    %v188 = vsel %vm186, %v174, 0
    %v191 = vsel %vm186, %v175, 0
    %v194 = vsel %vm186, %v176, 0
    %v197 = vsel %vm186, %v177, 0
    %199 = vmatprep.subr.mxu0 0.0
    %200 = vmatpush1.msra.mxu0 0.0
    %201 = vmatprep.subr.mxu0 0.0
    %202 = vmatpush1.msra.mxu0 0.0
    %203 = vmatprep.subr.mxu0 0.0
    %204 = vmatpush1.msra.mxu0 0.0
    %205 = vmatprep.subr.mxu0 0.0
    %206 = vmatpush1.msra.mxu0 0.0
    %207 = vmatprep.subr.mxu0 0.0
    %208 = vmatpush1.msra.mxu0 0.0
    %209 = vmatprep.subr.mxu0 0.0
    %210 = vmatpush1.msra.mxu0 0.0
    %211 = vmatprep.subr.mxu0 0.0
    %212 = vmatpush1.msra.mxu0 0.0
    %213 = vmatprep.subr.mxu0 0.0
    %214 = vmatpush1.msra.mxu0 0.0
    %215 = vmatprep.subr.mxu0 0.0
    %216 = vmatpush1.msra.mxu0 0.0
    %217 = vmatprep.subr.mxu0 0.0
    %218 = vmatpush1.msra.mxu0 0.0
    %219 = vmatprep.subr.mxu0 0.0
    %220 = vmatpush1.msra.mxu0 0.0
    %221 = vmatprep.subr.mxu0 0.0
    %222 = vmatpush1.msra.mxu0 0.0
    %223 = vmatprep.subr.mxu0 %v173
    %224 = vmatpush1.msra.mxu0 %v172
    %225 = vmatprep.subr.mxu0 %v171
    %226 = vmatpush1.msra.mxu0 %v170
    %227 = vmatprep.subr.mxu0 %v169
    %228 = vmatpush1.msra.mxu0 %v168
    %229 = vmatprep.subr.mxu0 %v167
    %230 = vmatpush1.msra.mxu0 %v166
    %231 = vmatprep.subr.mxu0 0.0
    %232 = vmatpush2.msra.mxu0 0.0
    %233 = vmatprep.subr.mxu0 0.0
    %234 = vmatpush2.msra.mxu0 0.0
    %235 = vmatprep.subr.mxu0 0.0
    %236 = vmatpush2.msra.mxu0 0.0
    %237 = vmatprep.subr.mxu0 0.0
    %238 = vmatpush2.msra.mxu0 0.0
    %239 = vmatprep.subr.mxu0 0.0
    %240 = vmatpush2.msra.mxu0 0.0
    %241 = vmatprep.subr.mxu0 0.0
    %242 = vmatpush2.msra.mxu0 0.0
    %243 = vmatprep.subr.mxu0 0.0
    %244 = vmatpush2.msra.mxu0 0.0
    %245 = vmatprep.subr.mxu0 0.0
    %246 = vmatpush2.msra.mxu0 0.0
    %247 = vmatprep.subr.mxu0 0.0
    %248 = vmatpush2.msra.mxu0 0.0
    %249 = vmatprep.subr.mxu0 0.0
    %250 = vmatpush2.msra.mxu0 0.0
    %251 = vmatprep.subr.mxu0 0.0
    %252 = vmatpush2.msra.mxu0 0.0
    %253 = vmatprep.subr.mxu0 0.0
    %254 = vmatpush2.msra.mxu0 0.0
    %255 = vmatprep.subr.mxu0 0.0
    %256 = vmatpush2.msra.mxu0 0.0
    %257 = vmatprep.subr.mxu0 0.0
    %258 = vmatpush2.msra.mxu0 0.0
    %259 = vmatprep.subr.mxu0 0.0
    %260 = vmatpush2.msra.mxu0 0.0
    %261 = vmatprep.subr.mxu0 0.0
    %262 = vmatpush2.msra.mxu0 0.0
    %263 = vmatprep.mubr.f32.mxu0 0.0
    %264 = vmatmul.mubr.f32.gmra.mxu0 %v188
    %v265 = vpop.f32.mrf.mxu0
    %v266 = vadd.f32 %v178, %v265
    %v267 = vpop.f32.mrf.mxu0
    %v268 = vadd.f32 %v179, %v267
    %269 = vmatprep.mubr.f32.mxu0 0.0
    %270 = vmatmul.mubr.f32.gmra.mxu0 %v191
    %v271 = vpop.f32.mrf.mxu0
    %v272 = vadd.f32 %v180, %v271
    %v273 = vpop.f32.mrf.mxu0
    %v274 = vadd.f32 %v181, %v273
    %275 = vmatprep.mubr.f32.mxu0 0.0
    %276 = vmatmul.mubr.f32.gmra.mxu0 %v194
    %v277 = vpop.f32.mrf.mxu0
    %v278 = vadd.f32 %v182, %v277
    %v279 = vpop.f32.mrf.mxu0
    %v280 = vadd.f32 %v183, %v279
    %281 = vmatprep.mubr.f32.mxu0 0.0
    %282 = vmatmul.mubr.f32.gmra.mxu0 %v197
    %v283 = vpop.f32.mrf.mxu0
    %v284 = vadd.f32 %v184, %v283
    %v285 = vpop.f32.mrf.mxu0
    %v286 = vadd.f32 %v185, %v285
    %287 = vdwg.mxu0
    %v288 = vmax.f32 %v266, 0.0
    %v289 = vmax.f32 %v268, 0.0
    %v290 = vmax.f32 %v272, 0.0
    %v291 = vmax.f32 %v274, 0.0
    %v292 = vmax.f32 %v278, 0.0
    %v293 = vmax.f32 %v280, 0.0
    %v294 = vmax.f32 %v284, 0.0
    %v295 = vmax.f32 %v286, 0.0
    %v296 = vld [vmem:[%s2 + $0x20] sm:$0xff]
    %v297 = vld [vmem:[%s2 + $0x28] sm:$0xff]
    %v298 = vld [vmem:[%s2 + $0x30] sm:$0xff]
    %v299 = vld [vmem:[%s2 + $0x38] sm:$0xff]
    %v300 = vld [vmem:[%s3 + $0x40] sm:$0xff]
    %v301 = vld [vmem:[%s3 + $0x48] sm:$0xff]
    %v302 = vld [vmem:[%s3 + $0x50] sm:$0xff]
    %v303 = vld [vmem:[%s3 + $0x58] sm:$0xff]
    %v304 = vld [vmem:[%s3 + $0x60] sm:$0xff]
    %v305 = vld [vmem:[%s3 + $0x68] sm:$0xff]
    %v306 = vld [vmem:[%s3 + $0x70] sm:$0xff]
    %v307 = vld [vmem:[%s3 + $0x78] sm:$0xff]
    %v309 = vsel %vm186, %v296, 0
    %v312 = vsel %vm186, %v297, 0
    %v315 = vsel %vm186, %v298, 0
    %v318 = vsel %vm186, %v299, 0
    %320 = vmatprep.subr.mxu0 0.0
    %321 = vmatpush1.msra.mxu0 0.0
    %322 = vmatprep.subr.mxu0 0.0
    %323 = vmatpush1.msra.mxu0 0.0
    %324 = vmatprep.subr.mxu0 0.0
    %325 = vmatpush1.msra.mxu0 0.0
    %326 = vmatprep.subr.mxu0 0.0
    %327 = vmatpush1.msra.mxu0 0.0
    %328 = vmatprep.subr.mxu0 0.0
    %329 = vmatpush1.msra.mxu0 0.0
    %330 = vmatprep.subr.mxu0 0.0
    %331 = vmatpush1.msra.mxu0 0.0
    %332 = vmatprep.subr.mxu0 0.0
    %333 = vmatpush1.msra.mxu0 0.0
    %334 = vmatprep.subr.mxu0 0.0
    %335 = vmatpush1.msra.mxu0 0.0
    %336 = vmatprep.subr.mxu0 0.0
    %337 = vmatpush1.msra.mxu0 0.0
    %338 = vmatprep.subr.mxu0 0.0
    %339 = vmatpush1.msra.mxu0 0.0
    %340 = vmatprep.subr.mxu0 0.0
    %341 = vmatpush1.msra.mxu0 0.0
    %342 = vmatprep.subr.mxu0 0.0
    %343 = vmatpush1.msra.mxu0 0.0
    %344 = vmatprep.subr.mxu0 %v295
    %345 = vmatpush1.msra.mxu0 %v294
    %346 = vmatprep.subr.mxu0 %v293
    %347 = vmatpush1.msra.mxu0 %v292
    %348 = vmatprep.subr.mxu0 %v291
    %349 = vmatpush1.msra.mxu0 %v290
    %350 = vmatprep.subr.mxu0 %v289
    %351 = vmatpush1.msra.mxu0 %v288
    %352 = vmatprep.subr.mxu0 0.0
    %353 = vmatpush2.msra.mxu0 0.0
    %354 = vmatprep.subr.mxu0 0.0
    %355 = vmatpush2.msra.mxu0 0.0
    %356 = vmatprep.subr.mxu0 0.0
    %357 = vmatpush2.msra.mxu0 0.0
    %358 = vmatprep.subr.mxu0 0.0
    %359 = vmatpush2.msra.mxu0 0.0
    %360 = vmatprep.subr.mxu0 0.0
    %361 = vmatpush2.msra.mxu0 0.0
    %362 = vmatprep.subr.mxu0 0.0
    %363 = vmatpush2.msra.mxu0 0.0
    %364 = vmatprep.subr.mxu0 0.0
    %365 = vmatpush2.msra.mxu0 0.0
    %366 = vmatprep.subr.mxu0 0.0
    %367 = vmatpush2.msra.mxu0 0.0
    %368 = vmatprep.subr.mxu0 0.0
    %369 = vmatpush2.msra.mxu0 0.0
    %370 = vmatprep.subr.mxu0 0.0
    %371 = vmatpush2.msra.mxu0 0.0
    %372 = vmatprep.subr.mxu0 0.0
    %373 = vmatpush2.msra.mxu0 0.0
    %374 = vmatprep.subr.mxu0 0.0
    %375 = vmatpush2.msra.mxu0 0.0
    %376 = vmatprep.subr.mxu0 0.0
    %377 = vmatpush2.msra.mxu0 0.0
    %378 = vmatprep.subr.mxu0 0.0
    %379 = vmatpush2.msra.mxu0 0.0
    %380 = vmatprep.subr.mxu0 0.0
    %381 = vmatpush2.msra.mxu0 0.0
    %382 = vmatprep.subr.mxu0 0.0
    %383 = vmatpush2.msra.mxu0 0.0
    %384 = vmatprep.mubr.f32.mxu0 0.0
    %385 = vmatmul.mubr.f32.gmra.mxu0 %v309
    %v386 = vpop.f32.mrf.mxu0
    %v387 = vadd.f32 %v300, %v386
    %v388 = vpop.f32.mrf.mxu0
    %v389 = vadd.f32 %v301, %v388
    %390 = vmatprep.mubr.f32.mxu0 0.0
    %391 = vmatmul.mubr.f32.gmra.mxu0 %v312
    %v392 = vpop.f32.mrf.mxu0
    %v393 = vadd.f32 %v302, %v392
    %v394 = vpop.f32.mrf.mxu0
    %v395 = vadd.f32 %v303, %v394
    %396 = vmatprep.mubr.f32.mxu0 0.0
    %397 = vmatmul.mubr.f32.gmra.mxu0 %v315
    %v398 = vpop.f32.mrf.mxu0
    %v399 = vadd.f32 %v304, %v398
    %v400 = vpop.f32.mrf.mxu0
    %v401 = vadd.f32 %v305, %v400
    %402 = vmatprep.mubr.f32.mxu0 0.0
    %403 = vmatmul.mubr.f32.gmra.mxu0 %v318
    %v404 = vpop.f32.mrf.mxu0
    %v405 = vadd.f32 %v306, %v404
    %v406 = vpop.f32.mrf.mxu0
    %v407 = vadd.f32 %v307, %v406
    %408 = vdwg.mxu0
    %v409 = vmax.f32 %v387, 0.0
    %v410 = vmax.f32 %v389, 0.0
    %v411 = vmax.f32 %v393, 0.0
    %v412 = vmax.f32 %v395, 0.0
    %v413 = vmax.f32 %v399, 0.0
    %v414 = vmax.f32 %v401, 0.0
    %v415 = vmax.f32 %v405, 0.0
    %v416 = vmax.f32 %v407, 0.0
    %v417 = vld [vmem:[%s2 + $0x40] sm:$0xff]
    %v418 = vld [vmem:[%s3 + $0x80] sm:$0xff]
    %v419 = vld [vmem:[%s3 + $0x88] sm:$0xff]
    %v421 = vsel %vm186, %v417, 0
    %423 = vmatprep.subr.mxu0 0.0
    %424 = vmatpush1.msra.mxu0 0.0
    %425 = vmatprep.subr.mxu0 0.0
    %426 = vmatpush1.msra.mxu0 0.0
    %427 = vmatprep.subr.mxu0 0.0
    %428 = vmatpush1.msra.mxu0 0.0
    %429 = vmatprep.subr.mxu0 0.0
    %430 = vmatpush1.msra.mxu0 0.0
    %431 = vmatprep.subr.mxu0 0.0
    %432 = vmatpush1.msra.mxu0 0.0
    %433 = vmatprep.subr.mxu0 0.0
    %434 = vmatpush1.msra.mxu0 0.0
    %435 = vmatprep.subr.mxu0 0.0
    %436 = vmatpush1.msra.mxu0 0.0
    %437 = vmatprep.subr.mxu0 0.0
    %438 = vmatpush1.msra.mxu0 0.0
    %439 = vmatprep.subr.mxu0 0.0
    %440 = vmatpush1.msra.mxu0 0.0
    %441 = vmatprep.subr.mxu0 0.0
    %442 = vmatpush1.msra.mxu0 0.0
    %443 = vmatprep.subr.mxu0 0.0
    %444 = vmatpush1.msra.mxu0 0.0
    %445 = vmatprep.subr.mxu0 0.0
    %446 = vmatpush1.msra.mxu0 0.0
    %447 = vmatprep.subr.mxu0 %v416
    %448 = vmatpush1.msra.mxu0 %v415
    %449 = vmatprep.subr.mxu0 %v414
    %450 = vmatpush1.msra.mxu0 %v413
    %451 = vmatprep.subr.mxu0 %v412
    %452 = vmatpush1.msra.mxu0 %v411
    %453 = vmatprep.subr.mxu0 %v410
    %454 = vmatpush1.msra.mxu0 %v409
    %455 = vmatprep.subr.mxu0 0.0
    %456 = vmatpush2.msra.mxu0 0.0
    %457 = vmatprep.subr.mxu0 0.0
    %458 = vmatpush2.msra.mxu0 0.0
    %459 = vmatprep.subr.mxu0 0.0
    %460 = vmatpush2.msra.mxu0 0.0
    %461 = vmatprep.subr.mxu0 0.0
    %462 = vmatpush2.msra.mxu0 0.0
    %463 = vmatprep.subr.mxu0 0.0
    %464 = vmatpush2.msra.mxu0 0.0
    %465 = vmatprep.subr.mxu0 0.0
    %466 = vmatpush2.msra.mxu0 0.0
    %467 = vmatprep.subr.mxu0 0.0
    %468 = vmatpush2.msra.mxu0 0.0
    %469 = vmatprep.subr.mxu0 0.0
    %470 = vmatpush2.msra.mxu0 0.0
    %471 = vmatprep.subr.mxu0 0.0
    %472 = vmatpush2.msra.mxu0 0.0
    %473 = vmatprep.subr.mxu0 0.0
    %474 = vmatpush2.msra.mxu0 0.0
    %475 = vmatprep.subr.mxu0 0.0
    %476 = vmatpush2.msra.mxu0 0.0
    %477 = vmatprep.subr.mxu0 0.0
    %478 = vmatpush2.msra.mxu0 0.0
    %479 = vmatprep.subr.mxu0 0.0
    %480 = vmatpush2.msra.mxu0 0.0
    %481 = vmatprep.subr.mxu0 0.0
    %482 = vmatpush2.msra.mxu0 0.0
    %483 = vmatprep.subr.mxu0 0.0
    %484 = vmatpush2.msra.mxu0 0.0
    %485 = vmatprep.subr.mxu0 0.0
    %486 = vmatpush2.msra.mxu0 0.0
    %487 = vmatprep.mubr.f32.mxu0 0.0
    %488 = vmatmul.mubr.f32.gmra.mxu0 %v421
    %v489 = vpop.f32.mrf.mxu0
    %v490 = vadd.f32 %v418, %v489
    %v491 = vpop.f32.mrf.mxu0
    %v492 = vadd.f32 %v419, %v491
    %493 = vdwg.mxu0
    %v494 = vadd.f32 %v18, %v490
    %v495 = vadd.f32 %v19, %v492
    %496 = vst [vmem:[#allocation2] sm:$0xff] %v494
    %497 = vst [vmem:[#allocation2 + $0x8] sm:$0xff] %v495
    // Predicated region
    $region18: #{tpu_custom_call.1} parent=1 // pred_check
      _
    $region19: #{tpu_custom_call.1} parent=1 // pred_check_branch
      %499 = sbr.rel (0) target = $region21
    $region20: #{tpu_custom_call.1} parent=1 // pred_region
      %s501 = ssub.s32 256, 256
      %502 = vsyncadd [#allocation3], %s501
      %s504 = sshll.u32 [#allocation2], 4
      %s505 = int_to_ptr.vmem [resolvable:$true] %s504
      %507 = dma.vmem_to_hbm [thread:$0]  %s505, 256, %s4, [#allocation3]
    $region21: #{tpu_custom_call.1} parent=1 // pred_fallthru
      _
    // Predicated region
    $region22: #{tpu_custom_call.1} parent=1 // pred_check
      _
    $region23: #{tpu_custom_call.1} parent=1 // pred_check_branch
      %509 = sbr.rel (0) target = $region25
    $region24: #{tpu_custom_call.1} parent=1 // pred_region
      %510 = dma.done [#allocation3], 256
    $region25: #{tpu_custom_call.1} parent=1 // pred_fallthru
      _
    %511 = vsyncpa [#allocation3], 1

</llo_original>
